<compile_context>
chip_gen: v5e
topology: v5e:2x2
jax: 0.10.0
libtpu: 0.0.40
codegen_flags: <defaults>
</compile_context>

<pallas_src>
import functools

import jax
import jax.numpy as jnp
from jax.experimental import pallas as pl
from jax.experimental.pallas import tpu as pltpu

LANE = 128  # pad output features to a full lane width -> unmasked stores


def _linear_kernel(x_ref, wt_ref, b_ref, o_ref):
    # One (TB, D) x (D, 128) MXU matmul per grid step, f32 accumulation + bias.
    o_ref[...] = (
        jnp.dot(x_ref[...], wt_ref[...], preferred_element_type=jnp.float32)
        + b_ref[...]
    )


def prepare_params(weight, bias):
    """One-time parameter prep (hoisted out of the per-call path).

    weight: [O, D] float32 (PyTorch nn.Linear layout), bias: [O] float32.
    Returns (wt_pad [D, LANE], b_pad [1, LANE], O).
    """
    O, D = weight.shape
    wt_pad = jnp.zeros((D, LANE), jnp.float32).at[:, :O].set(weight.T)
    b_pad = jnp.zeros((1, LANE), jnp.float32).at[:, :O].set(bias.reshape(1, O))
    return wt_pad, b_pad, int(O)


@functools.partial(jax.jit, static_argnames=("out_features",))
def torch_model_forward(x, wt_pad, b_pad, out_features=5):
    """x: [B, D] f32; wt_pad: [D, LANE] f32; b_pad: [1, LANE] f32 -> [B, O]."""
    B, D = x.shape

    # Row-block tile: full batch if small (keeps the (8,128) rule satisfied by
    # using the full array extent), otherwise 512 rows — large enough to reach
    # near the HBM roofline, small enough to leave VMEM headroom on v7x.
    TB = B if B <= 512 else 512

    out_padded = pl.pallas_call(
        _linear_kernel,
        out_shape=jax.ShapeDtypeStruct((B, LANE), jnp.float32),
        grid_spec=pl.GridSpec(
            grid=(pl.cdiv(B, TB),),
            in_specs=[
                pl.BlockSpec((TB, D), lambda i: (i, 0)),     # x row block
                pl.BlockSpec((D, LANE), lambda i: (0, 0)),   # weight (resident)
                pl.BlockSpec((1, LANE), lambda i: (0, 0)),   # bias (resident)
            ],
            out_specs=pl.BlockSpec((TB, LANE), lambda i: (i, 0)),
        ),
        compiler_params=pltpu.CompilerParams(
            # Independent row blocks -> shard across v7x's 2 TensorCores.
            dimension_semantics=("parallel",),
        ),
    )(x, wt_pad, b_pad)

    # Slice off the lane padding to recover the true O=5 logits.
    return out_padded[:, :out_features]


if __name__ == "__main__":
    # Small shapes consistent with the module: batch=8, input_size=32, out=5.
    B, D, O = 8, 32, 5
    key = jax.random.PRNGKey(0)
    kx, kw, kb = jax.random.split(key, 3)

    x = jax.random.normal(kx, (B, D), dtype=jnp.float32)
    bound = (1.0 / D) ** 0.5
    weight = jax.random.uniform(kw, (O, D), jnp.float32, minval=-bound, maxval=bound)
    bias = jax.random.uniform(kb, (O,), jnp.float32, minval=-bound, maxval=bound)

    # Parameter prep happens once (transpose + lane padding hoisted here).
    wt_pad, b_pad, out_features = prepare_params(weight, bias)

    out = torch_model_forward(x, wt_pad, b_pad, out_features=out_features)
    out = jax.block_until_ready(out)

    # Sanity check against a plain-JAX reference.
    ref = x @ weight.T + bias
    assert out.shape == (B, O), out.shape
    assert jnp.allclose(out, ref, atol=1e-5, rtol=1e-5)

    print("KERNEL_OK")
</pallas_src>

<mosaic_0001>
module attributes {stable_mosaic.version = 11 : i64} {
  func.func @_linear_kernel(%arg0: i32, %arg1: memref<8x32xf32, #tpu.memory_space<vmem>>, %arg2: memref<32x128xf32, #tpu.memory_space<vmem>>, %arg3: memref<1x128xf32, #tpu.memory_space<vmem>>, %arg4: memref<8x128xf32, #tpu.memory_space<vmem>>) attributes {dimension_semantics = [#tpu.dimension_semantics<parallel>], iteration_bounds = array<i64: 1>, scalar_prefetch = 0 : i64, scratch_operands = 0 : i64, tpu.core_type = #tpu.core_type<tc>, window_params = [{transform_indices = @transform_0, window_bounds = array<i64: 8, 32>}, {pipeline_mode = #tpu.pipeline_mode<synchronous>, transform_indices = @transform_1, window_bounds = array<i64: 32, 128>}, {pipeline_mode = #tpu.pipeline_mode<synchronous>, transform_indices = @transform_2, window_bounds = array<i64: 1, 128>}, {transform_indices = @transform_3, window_bounds = array<i64: 8, 128>}]} {
    %c0 = arith.constant 0 : index
    %c0_0 = arith.constant 0 : index
    %0 = vector.load %arg1[%c0, %c0_0] : memref<8x32xf32, #tpu.memory_space<vmem>>, vector<8x32xf32>
    %c0_1 = arith.constant 0 : index
    %c0_2 = arith.constant 0 : index
    %1 = vector.load %arg2[%c0_1, %c0_2] : memref<32x128xf32, #tpu.memory_space<vmem>>, vector<32x128xf32>
    %cst = arith.constant dense<0.000000e+00> : vector<8x128xf32>
    %2 = tpu.matmul %0, %1, %cst {dimension_numbers = #tpu.dot_dimension_numbers<[1], [0], [0], [1], [0, 0, 1, 1], [], []>} : vector<8x32xf32>, vector<32x128xf32>, vector<8x128xf32> -> vector<8x128xf32>
    %c0_3 = arith.constant 0 : index
    %c0_4 = arith.constant 0 : index
    %3 = vector.load %arg3[%c0_3, %c0_4] : memref<1x128xf32, #tpu.memory_space<vmem>>, vector<1x128xf32>
    %4 = vector.broadcast %3 : vector<1x128xf32> to vector<8x128xf32>
    %5 = arith.addf %2, %4 : vector<8x128xf32>
    %c0_5 = arith.constant 0 : index
    %c0_6 = arith.constant 0 : index
    %6 = vector.load %arg4[%c0_5, %c0_6] : memref<8x128xf32, #tpu.memory_space<vmem>>, vector<8x128xf32>
    tpu.vector_store %arg4[%c0_5, %c0_6], %5 {strides = array<i32>} : memref<8x128xf32, #tpu.memory_space<vmem>>, vector<8x128xf32>,
    return
  }
  func.func @transform_0(%arg0: i32) -> (i32, i32) {
    %c0_i32 = arith.constant 0 : i32
    %c0_i32_0 = arith.constant 0 : i32
    return %arg0, %c0_i32 : i32, i32
  }
  func.func @transform_1(%arg0: i32) -> (i32, i32) {
    %c0_i32 = arith.constant 0 : i32
    %c0_i32_0 = arith.constant 0 : i32
    %c0_i32_1 = arith.constant 0 : i32
    return %c0_i32, %c0_i32_0 : i32, i32
  }
  func.func @transform_2(%arg0: i32) -> (i32, i32) {
    %c0_i32 = arith.constant 0 : i32
    %c0_i32_0 = arith.constant 0 : i32
    %c0_i32_1 = arith.constant 0 : i32
    return %c0_i32, %c0_i32_0 : i32, i32
  }
  func.func @transform_3(%arg0: i32) -> (i32, i32) {
    %c0_i32 = arith.constant 0 : i32
    %c0_i32_0 = arith.constant 0 : i32
    return %arg0, %c0_i32 : i32, i32
  }
}

</mosaic_0001>

<llo_original>
// kernel: torch_model_forward.1
$region0: #{torch_model_forward.1}
  #allocation0 [shape = 'u32[]', space=smem, size = 0x4, offset = 0x4, fixed_abs, tag = 'smem constant byte address 0x4 - core index']
  #allocation1 [shape = 'u32[72,128]{1,0:T(1,128)}', space=vmem, size = 0x9000, scoped, tag = 'internal scratch']
  %s0 = inlined_call_operand.hbm [shape: f32[8,32], index: 0, kind: input, shape index: {}]
  %s1 = inlined_call_operand.hbm [shape: f32[32,128], index: 1, kind: input, shape index: {}]
  %s2 = inlined_call_operand.vmem [shape: f32[1,128], index: 2, kind: input, shape index: {}]
  %s3 = inlined_call_operand.hbm [shape: f32[8,128], index: 3, kind: output, shape index: {}]
  %s4 = sld [smem:[#allocation0]]
  $region30: #{torch_model_forward.1} parent=0
    _
  %s6 = ssub.s32 1, %s4
  %s7 = scalar_select 0, %s6, %s4
  $region1: #{torch_model_forward.1} parent=0
    #allocation2 [shape = 'u8[4096]{0}', space=vmem, size = 0x1000, scoped, tag = 'input window, operand 0, single buffered']
    #allocation3 [shape = 's32[1]{0}', space=sflag, size = 0x4, scoped, tag = 'scoped memory for torch_model_forward.1']
    #allocation4 [shape = 's32[1]{0}', space=sflag, size = 0x4, scoped, tag = 'scoped memory for torch_model_forward.1']
    #allocation5 [shape = 'u8[16384]{0}', space=vmem, size = 0x4000, scoped, tag = 'input window, operand 1, single buffered']
    #allocation6 [shape = 's32[1]{0}', space=sflag, size = 0x4, scoped, tag = 'scoped memory for torch_model_forward.1']
    #allocation7 [shape = 'u8[4096]{0}', space=vmem, size = 0x1000, scoped, tag = 'output window, operand 0, single buffered']
    %8 = vsyncpa [#allocation3], 0
    %9 = vsyncpa [#allocation6], 0
    %10 = vsyncpa [#allocation4], 0
    // Predicated region
    $region2: #{torch_model_forward.1} parent=1 // pred_check
      _
    $region3: #{torch_model_forward.1} parent=1 // pred_check_branch
      %12 = sbr.rel (0) target = $region5
    $region4: #{torch_model_forward.1} parent=1 // pred_region
      %14 = vsyncadd [#allocation3], 0
      %s16 = sshll.u32 %s0, 4
      %s17 = int_to_ptr.hbm [resolvable:$true] %s16
      %s18 = sshll.u32 [#allocation2], 4
      %s19 = int_to_ptr.vmem [resolvable:$true] %s18
      %21 = dma.hbm_to_vmem [thread:$0]  %s17, 128, %s19, [#allocation3]
    $region5: #{torch_model_forward.1} parent=1 // pred_fallthru
      _
    // Predicated region
    $region6: #{torch_model_forward.1} parent=1 // pred_check
      _
    $region7: #{torch_model_forward.1} parent=1 // pred_check_branch
      %23 = sbr.rel (0) target = $region9
    $region8: #{torch_model_forward.1} parent=1 // pred_region
      %25 = vsyncadd [#allocation6], 0
      %s26 = sshll.u32 %s1, 4
      %s27 = int_to_ptr.hbm [resolvable:$true] %s26
      %s28 = sshll.u32 [#allocation5], 4
      %s29 = int_to_ptr.vmem [resolvable:$true] %s28
      %34 = dma.hbm_to_vmem [thread:$0]  %s27, 512, %s29, [#allocation6], 128, 128, 8
    $region9: #{torch_model_forward.1} parent=1 // pred_fallthru
      _
    // Predicated region
    $region10: #{torch_model_forward.1} parent=1 // pred_check
      _
    $region11: #{torch_model_forward.1} parent=1 // pred_check_branch
      %36 = sbr.rel (0) target = $region13
    $region12: #{torch_model_forward.1} parent=1 // pred_region
      _
    $region13: #{torch_model_forward.1} parent=1 // pred_fallthru
      _
    // Predicated region
    $region14: #{torch_model_forward.1} parent=1 // pred_check
      _
    $region15: #{torch_model_forward.1} parent=1 // pred_check_branch
      %38 = sbr.rel (0) target = $region17
    $region16: #{torch_model_forward.1} parent=1 // pred_region
      %40 = dma.done [#allocation3], 128
    $region17: #{torch_model_forward.1} parent=1 // pred_fallthru
      _
    // Predicated region
    $region18: #{torch_model_forward.1} parent=1 // pred_check
      _
    $region19: #{torch_model_forward.1} parent=1 // pred_check_branch
      %42 = sbr.rel (0) target = $region21
    $region20: #{torch_model_forward.1} parent=1 // pred_region
      %44 = dma.done [#allocation6], 512
    $region21: #{torch_model_forward.1} parent=1 // pred_fallthru
      _
    %v45 = vld [vmem:[#allocation2] sm:$0xff]
    %v46 = vld [vmem:[#allocation5] sm:$0xff]
    %v47 = vld [vmem:[#allocation5 + $0x8] sm:$0xff]
    %v48 = vld [vmem:[#allocation5 + $0x10] sm:$0xff]
    %v49 = vld [vmem:[#allocation5 + $0x18] sm:$0xff]
    %v50 = vld [vmem:[%s2] sm:$0x1]
    %v52 = vperm.slane %v50, 0
    %vm54 = vcmask 261120
    %v56 = vsel %vm54, %v45, 0
    %58 = vmatpush.msra.mxu0 0.0
    %59 = vmatpush.msra.mxu0 0.0
    %60 = vmatpush.msra.mxu0 0.0
    %61 = vmatpush.msra.mxu0 0.0
    %62 = vmatpush.msra.mxu0 0.0
    %63 = vmatpush.msra.mxu0 0.0
    %64 = vmatpush.msra.mxu0 0.0
    %65 = vmatpush.msra.mxu0 0.0
    %66 = vmatpush.msra.mxu0 0.0
    %67 = vmatpush.msra.mxu0 0.0
    %68 = vmatpush.msra.mxu0 0.0
    %69 = vmatpush.msra.mxu0 0.0
    %70 = vmatpush.msra.mxu0 %v49
    %71 = vmatpush.msra.mxu0 %v48
    %72 = vmatpush.msra.mxu0 %v47
    %73 = vmatpush.msra.mxu0 %v46
    %74 = vmatmul.f32.gmra.mxu0 %v56
    %v75 = vpop.f32.mrf.mxu0
    %v76 = vadd.f32 %v52, %v75
    %77 = vdwg.mxu0
    %78 = vst [vmem:[#allocation7] sm:$0xff] %v76
    // Predicated region
    $region22: #{torch_model_forward.1} parent=1 // pred_check
      _
    $region23: #{torch_model_forward.1} parent=1 // pred_check_branch
      %80 = sbr.rel (0) target = $region25
    $region24: #{torch_model_forward.1} parent=1 // pred_region
      %82 = vsyncadd [#allocation4], 0
      %s84 = sshll.u32 [#allocation7], 4
      %s85 = int_to_ptr.vmem [resolvable:$true] %s84
      %s86 = sshll.u32 %s3, 4
      %s87 = int_to_ptr.hbm [resolvable:$true] %s86
      %89 = dma.vmem_to_hbm [thread:$0]  %s85, 128, %s87, [#allocation4]
    $region25: #{torch_model_forward.1} parent=1 // pred_fallthru
      _
    // Predicated region
    $region26: #{torch_model_forward.1} parent=1 // pred_check
      _
    $region27: #{torch_model_forward.1} parent=1 // pred_check_branch
      %91 = sbr.rel (0) target = $region29
    $region28: #{torch_model_forward.1} parent=1 // pred_region
      %93 = dma.done [#allocation4], 128
    $region29: #{torch_model_forward.1} parent=1 // pred_fallthru
      _
    %94 = vsyncpa [#allocation3], 1
    %95 = vsyncpa [#allocation6], 1
    %96 = vsyncpa [#allocation4], 1

</llo_original>
